<compile_context>
chip_gen: v6e
topology: v6e:2x2x1
jax: 0.10.0
libtpu: 0.0.40
codegen_flags: <defaults>
</compile_context>

<pallas_src>
import functools

import jax
import jax.numpy as jnp
from jax.experimental import pallas as pl
from jax.experimental.pallas import tpu as pltpu


def _round_up(x: int, m: int) -> int:
    return (x + m - 1) // m * m


def _largest_tile(full: int, cap: int, unit: int) -> int:
    """Largest multiple of `unit` that divides `full` and is <= max(cap, unit)."""
    cap = max(cap, unit)
    best = unit
    n = full // unit
    for d in range(1, n + 1):
        if n % d == 0 and d * unit <= cap:
            best = d * unit
    return best


def _vmem_budget_bytes() -> int:
    """Per-generation scoped-VMEM budget with headroom.

    v5e/v6e have 128 MiB physical VMEM, v7x has 64 MiB per TensorCore; take
    ~75% of whatever the runtime reports and clamp to a safe range.
    """
    try:
        cap = getattr(pltpu.get_tpu_info(), "vmem_capacity_bytes", None)
    except Exception:
        cap = None
    if not cap:
        cap = 64 * 1024 * 1024  # conservative (v7x-sized) if query unavailable
    budget = int(cap * 0.75)
    return max(32 * 1024 * 1024, min(budget, 112 * 1024 * 1024))


# --------------------------------------------------------------------------- #
# Kernels
# --------------------------------------------------------------------------- #
def _linear_kernel_fast(x_ref, w_ref, b_ref, o_ref):
    """Whole (Kp, Np) weight panel is VMEM-resident; one matmul per M tile."""
    acc = jnp.dot(x_ref[...], w_ref[...], preferred_element_type=jnp.float32)
    o_ref[...] = (acc + b_ref[...].astype(jnp.float32)).astype(o_ref.dtype)


def _linear_kernel_tiled(x_ref, w_ref, b_ref, o_ref, acc_ref):
    """(M, N, K) tiled matmul; K is the innermost (reduction) grid axis."""
    k = pl.program_id(2)
    nk = pl.num_programs(2)
    partial = jnp.dot(x_ref[...], w_ref[...], preferred_element_type=jnp.float32)

    @pl.when(k == 0)
    def _():
        acc_ref[...] = jnp.zeros_like(acc_ref)

    @pl.when(k < nk - 1)
    def _():
        acc_ref[...] += partial

    @pl.when(k == nk - 1)
    def _():
        # Fold the last partial product + bias straight into the output store
        # (no extra accumulator RMW on the final K step).
        o_ref[...] = (acc_ref[...] + partial
                      + b_ref[...].astype(jnp.float32)).astype(o_ref.dtype)


# --------------------------------------------------------------------------- #
# Host-side wrappers
# --------------------------------------------------------------------------- #
def prepare_linear_params(w_t, b, *, use_bf16: bool = True):
    """One-time weight prep (do this OUTSIDE the per-step call).

    w_t: [input_dim, latent_dim]  (PyTorch weight transposed)
    b:   [latent_dim] or [1, latent_dim]

    Pads K/N up to multiples of 128 (lane-dense) and optionally casts the
    weight to bfloat16 for the MXU; the bias stays f32 (added to the f32
    accumulator). Hoisting this out of the forward call avoids re-streaming the
    static weight through an XLA pad/convert op on every step.
    """
    din, dlat = w_t.shape
    kp = _round_up(din, 128)
    np_ = _round_up(dlat, 128)
    if (kp, np_) != (din, dlat):
        w_t = jnp.pad(w_t, ((0, kp - din), (0, np_ - dlat)))
    b = jnp.asarray(b, jnp.float32).reshape(1, dlat)
    if np_ != dlat:
        b = jnp.pad(b, ((0, 0), (0, np_ - dlat)))
    if use_bf16:
        w_t = w_t.astype(jnp.bfloat16)
    return w_t, b


@functools.partial(
    jax.jit, static_argnames=("dlat", "tm", "tn", "tk", "force_tiled"))
def linear_encoder(x, w_p, b_p, *, dlat, tm=512, tn=1024, tk=1024,
                   force_tiled=False):
    """y = x @ W^T + b with W^T / b pre-padded (and optionally bf16-cast) by
    prepare_linear_params.

    x:   [B, input_dim]   (cast to w_p.dtype for the MXU; f32 accumulation)
    w_p: [Kp, Np]         padded weight (Kp >= input_dim, Np >= dlat; x128)
    b_p: [1, Np]          padded bias (f32)
    """
    B, din = x.shape
    kp, np_ = w_p.shape
    out_dtype = jnp.float32
    cdtype = w_p.dtype
    in_bytes = jnp.dtype(cdtype).itemsize
    budget = _vmem_budget_bytes()

    mp0 = _round_up(B, 8)
    tm_ = min(tm, mp0)
    # v7x megacore: avoid a single-tile parallel grid when the batch can split.
    if mp0 // tm_ < 2 and mp0 >= 16:
        tm_ = _round_up((mp0 + 1) // 2, 8)

    # ---- fast path: full weight panel resident in VMEM, grid over M only ----
    fast_bytes = (2 * kp * np_ * in_bytes      # weight (worst-case double buf)
                  + 2 * tm_ * kp * in_bytes    # x tiles
                  + 2 * np_ * 4                # bias
                  + 2 * tm_ * np_ * 4)         # output tiles (f32)
    use_fast = (not force_tiled) and fast_bytes <= budget

    if use_fast:
        mp = _round_up(B, tm_)
        if (mp, kp) != (B, din):
            x = jnp.pad(x, ((0, mp - B), (0, kp - din)))
        x = x.astype(cdtype)
        out = pl.pallas_call(
            _linear_kernel_fast,
            out_shape=jax.ShapeDtypeStruct((mp, np_), out_dtype),
            grid_spec=pltpu.PrefetchScalarGridSpec(
                num_scalar_prefetch=0,
                grid=(mp // tm_,),
                in_specs=[
                    pl.BlockSpec((tm_, kp), lambda i: (i, 0)),   # x tile
                    pl.BlockSpec((kp, np_), lambda i: (0, 0)),   # weight (resident)
                    pl.BlockSpec((1, np_), lambda i: (0, 0)),    # bias (resident)
                ],
                out_specs=pl.BlockSpec((tm_, np_), lambda i: (i, 0)),
            ),
            compiler_params=pltpu.CompilerParams(
                dimension_semantics=("parallel",),
                vmem_limit_bytes=budget,
            ),
            cost_estimate=pl.CostEstimate(
                flops=2 * mp * np_ * kp,
                transcendentals=0,
                bytes_accessed=(mp * kp * in_bytes + kp * np_ * in_bytes
                                + np_ * 4 + mp * np_ * 4),
            ),
        )(x, w_p, b_p)
        if (mp, np_) == (B, dlat):
            return out
        return out[:B, :dlat]

    # ---- tiled fallback: (M, N, K) grid with an f32 VMEM accumulator --------
    tn_ = _largest_tile(np_, tn, 128)
    tk_ = _largest_tile(kp, tk, 128)

    def footprint(tm_v, tn_v, tk_v):
        return (2 * (tm_v * tk_v + tk_v * tn_v + tn_v) * in_bytes
                + 2 * tm_v * tn_v * 4        # output tiles (f32)
                + tm_v * tn_v * 4)           # accumulator scratch

    while footprint(tm_, tn_, tk_) > budget:
        if tk_ > 128:
            tk_ = _largest_tile(kp, tk_ // 2, 128)
        elif tn_ > 128:
            tn_ = _largest_tile(np_, tn_ // 2, 128)
        elif tm_ > 8:
            tm_ = max(8, _round_up(tm_ // 2, 8))
        else:
            break

    # Keep both v7x TensorCores busy if the parallel grid collapsed to 1 tile.
    if (mp0 // tm_) * (np_ // tn_) < 2 and mp0 >= 16:
        tm_ = _round_up((mp0 + 1) // 2, 8)

    mp = _round_up(B, tm_)
    if (mp, kp) != (B, din):
        # Zero K padding keeps the dot exact (padded weight rows are zero too).
        x = jnp.pad(x, ((0, mp - B), (0, kp - din)))
    x = x.astype(cdtype)

    grid = (mp // tm_, np_ // tn_, kp // tk_)
    # TODO(synk): if DMA is still exposed at these tile sizes, try
    # pipeline_mode=pl.Buffered(3) on the x / w specs (VMEM budget permitting).
    out = pl.pallas_call(
        _linear_kernel_tiled,
        out_shape=jax.ShapeDtypeStruct((mp, np_), out_dtype),
        grid_spec=pltpu.PrefetchScalarGridSpec(
            num_scalar_prefetch=0,
            grid=grid,
            in_specs=[
                pl.BlockSpec((tm_, tk_), lambda i, j, k: (i, k)),   # x
                pl.BlockSpec((tk_, tn_), lambda i, j, k: (k, j)),   # w_t
                pl.BlockSpec((1, tn_), lambda i, j, k: (0, j)),     # bias
            ],
            out_specs=pl.BlockSpec((tm_, tn_), lambda i, j, k: (i, j)),
            scratch_shapes=[pltpu.VMEM((tm_, tn_), jnp.float32)],
        ),
        compiler_params=pltpu.CompilerParams(
            dimension_semantics=("parallel", "parallel", "arbitrary"),
            vmem_limit_bytes=budget,
        ),
        cost_estimate=pl.CostEstimate(
            flops=2 * mp * np_ * kp,
            transcendentals=0,
            bytes_accessed=((np_ // tn_) * mp * kp * in_bytes
                            + (mp // tm_) * kp * np_ * in_bytes
                            + np_ * 4 + mp * np_ * 4),
        ),
    )(x, w_p, b_p)

    if (mp, np_) == (B, dlat):
        return out
    return out[:B, :dlat]


def init_linear_params(key, input_dim, latent_dim, dtype=jnp.float32):
    # Deterministic init mirroring torch.nn.Linear's default:
    # U(-1/sqrt(in_features), 1/sqrt(in_features)) for weight and bias.
    kw, kb = jax.random.split(key)
    bound = 1.0 / jnp.sqrt(jnp.asarray(input_dim, dtype))
    # PyTorch weight is [latent_dim, input_dim]; store transposed for the kernel.
    w = jax.random.uniform(
        kw, (latent_dim, input_dim), dtype, minval=-bound, maxval=bound
    )
    b = jax.random.uniform(
        kb, (latent_dim,), dtype, minval=-bound, maxval=bound
    )
    return w.T, b.reshape(1, latent_dim)


if __name__ == "__main__":
    key = jax.random.PRNGKey(0)
    k1, k2, k3, k4 = jax.random.split(key, 4)

    # --- Test 1: module-sized problem, bf16-on-MXU fast path -----------------
    batch, input_dim, latent_dim = 8, 32, 16
    x = jax.random.normal(k1, (batch, input_dim), jnp.float32)
    w_t, b = init_linear_params(k2, input_dim, latent_dim)
    ref = x @ w_t + b

    w_bf, b_bf = prepare_linear_params(w_t, b, use_bf16=True)
    out_bf = linear_encoder(x, w_bf, b_bf, dlat=latent_dim)
    jax.block_until_ready(out_bf)
    assert out_bf.shape == (batch, latent_dim)
    assert jnp.allclose(out_bf, ref, atol=5e-2, rtol=5e-2), "bf16 fast path mismatch"

    # --- Test 2: f32 fast path keeps the tight reference tolerance -----------
    w_f32, b_f32 = prepare_linear_params(w_t, b, use_bf16=False)
    out_f32 = linear_encoder(x, w_f32, b_f32, dlat=latent_dim)
    jax.block_until_ready(out_f32)
    assert jnp.allclose(out_f32, ref, atol=1e-5, rtol=1e-5), "f32 fast path mismatch"

    # --- Test 3: exercise the tiled (M, N, K) fallback kernel -----------------
    batch2, input_dim2, latent_dim2 = 32, 256, 384
    x2 = jax.random.normal(k3, (batch2, input_dim2), jnp.float32)
    w_t2, b2 = init_linear_params(k4, input_dim2, latent_dim2)
    ref2 = x2 @ w_t2 + b2
    w2_f32, b2_f32 = prepare_linear_params(w_t2, b2, use_bf16=False)
    out2 = linear_encoder(x2, w2_f32, b2_f32, dlat=latent_dim2,
                          tm=32, tn=128, tk=128, force_tiled=True)
    jax.block_until_ready(out2)
    assert out2.shape == (batch2, latent_dim2)
    assert jnp.allclose(out2, ref2, atol=1e-4, rtol=1e-4), "tiled path mismatch"

    print("KERNEL_OK")
</pallas_src>

<mosaic_0001>
module attributes {stable_mosaic.version = 11 : i64} {
  func.func @_linear_kernel_fast(%arg0: i32, %arg1: memref<8x128xbf16, #tpu.memory_space<vmem>>, %arg2: memref<128x128xbf16, #tpu.memory_space<vmem>>, %arg3: memref<1x128xf32, #tpu.memory_space<vmem>>, %arg4: memref<8x128xf32, #tpu.memory_space<vmem>>) attributes {dimension_semantics = [#tpu.dimension_semantics<parallel>], iteration_bounds = array<i64: 1>, scalar_prefetch = 0 : i64, scratch_operands = 0 : i64, tpu.core_type = #tpu.core_type<tc>, window_params = [{transform_indices = @transform_0, window_bounds = array<i64: 8, 128>}, {pipeline_mode = #tpu.pipeline_mode<synchronous>, transform_indices = @transform_1, window_bounds = array<i64: 128, 128>}, {pipeline_mode = #tpu.pipeline_mode<synchronous>, transform_indices = @transform_2, window_bounds = array<i64: 1, 128>}, {transform_indices = @transform_3, window_bounds = array<i64: 8, 128>}]} {
    %c0 = arith.constant 0 : index
    %c0_0 = arith.constant 0 : index
    %0 = vector.load %arg1[%c0, %c0_0] : memref<8x128xbf16, #tpu.memory_space<vmem>>, vector<8x128xbf16>
    %c0_1 = arith.constant 0 : index
    %c0_2 = arith.constant 0 : index
    %1 = vector.load %arg2[%c0_1, %c0_2] : memref<128x128xbf16, #tpu.memory_space<vmem>>, vector<128x128xbf16>
    %cst = arith.constant dense<0.000000e+00> : vector<8x128xf32>
    %2 = tpu.matmul %0, %1, %cst {dimension_numbers = #tpu.dot_dimension_numbers<[1], [0], [0], [1], [0, 0, 1, 1], [], []>} : vector<8x128xbf16>, vector<128x128xbf16>, vector<8x128xf32> -> vector<8x128xf32>
    %c0_3 = arith.constant 0 : index
    %c0_4 = arith.constant 0 : index
    %3 = vector.load %arg3[%c0_3, %c0_4] : memref<1x128xf32, #tpu.memory_space<vmem>>, vector<1x128xf32>
    %4 = vector.broadcast %3 : vector<1x128xf32> to vector<8x128xf32>
    %5 = arith.addf %2, %4 : vector<8x128xf32>
    %c0_5 = arith.constant 0 : index
    %c0_6 = arith.constant 0 : index
    %6 = vector.load %arg4[%c0_5, %c0_6] : memref<8x128xf32, #tpu.memory_space<vmem>>, vector<8x128xf32>
    tpu.vector_store %arg4[%c0_5, %c0_6], %5 {strides = array<i32>} : memref<8x128xf32, #tpu.memory_space<vmem>>, vector<8x128xf32>,
    return
  }
  func.func @transform_0(%arg0: i32) -> (i32, i32) {
    %c0_i32 = arith.constant 0 : i32
    %c0_i32_0 = arith.constant 0 : i32
    return %arg0, %c0_i32 : i32, i32
  }
  func.func @transform_1(%arg0: i32) -> (i32, i32) {
    %c0_i32 = arith.constant 0 : i32
    %c0_i32_0 = arith.constant 0 : i32
    %c0_i32_1 = arith.constant 0 : i32
    return %c0_i32, %c0_i32_0 : i32, i32
  }
  func.func @transform_2(%arg0: i32) -> (i32, i32) {
    %c0_i32 = arith.constant 0 : i32
    %c0_i32_0 = arith.constant 0 : i32
    %c0_i32_1 = arith.constant 0 : i32
    return %c0_i32, %c0_i32_0 : i32, i32
  }
  func.func @transform_3(%arg0: i32) -> (i32, i32) {
    %c0_i32 = arith.constant 0 : i32
    %c0_i32_0 = arith.constant 0 : i32
    return %arg0, %c0_i32 : i32, i32
  }
}

</mosaic_0001>

<llo_original>
// kernel: linear_encoder.1
$region0: #{linear_encoder.1}
  #allocation0 [shape = 'u32[]', space=smem, size = 0x4, offset = 0x4, fixed_abs, tag = 'smem constant byte address 0x4 - core index']
  #allocation1 [shape = 'u32[144,128]{1,0:T(1,128)}', space=vmem, size = 0x12000, scoped, tag = 'internal scratch']
  %s0 = inlined_call_operand.vmem [shape: bf16[8,128], index: 0, kind: input, shape index: {}]
  %s1 = inlined_call_operand.hbm [shape: bf16[128,128], index: 1, kind: input, shape index: {}]
  %s2 = inlined_call_operand.vmem [shape: f32[1,128], index: 2, kind: input, shape index: {}]
  %s3 = inlined_call_operand.hbm [shape: f32[8,128], index: 3, kind: output, shape index: {}]
  %s4 = sld [smem:[#allocation0]]
  $region26: #{linear_encoder.1} parent=0
    _
  %s6 = ssub.s32 1, %s4
  %s7 = scalar_select 0, %s6, %s4
  $region1: #{linear_encoder.1} parent=0
    #allocation2 [shape = 'u8[32768]{0}', space=vmem, size = 0x8000, scoped, tag = 'input window, operand 1, single buffered']
    #allocation3 [shape = 's32[1]{0}', space=sflag, size = 0x4, scoped, tag = 'scoped memory for linear_encoder.1']
    #allocation4 [shape = 's32[1]{0}', space=sflag, size = 0x4, scoped, tag = 'scoped memory for linear_encoder.1']
    #allocation5 [shape = 'u8[4096]{0}', space=vmem, size = 0x1000, scoped, tag = 'output window, operand 0, single buffered']
    %8 = vsyncpa [#allocation3], 0
    %9 = vsyncpa [#allocation4], 0
    // Predicated region
    $region2: #{linear_encoder.1} parent=1 // pred_check
      _
    $region3: #{linear_encoder.1} parent=1 // pred_check_branch
      %11 = sbr.rel (0) target = $region5
    $region4: #{linear_encoder.1} parent=1 // pred_region
      _
    $region5: #{linear_encoder.1} parent=1 // pred_fallthru
      _
    // Predicated region
    $region6: #{linear_encoder.1} parent=1 // pred_check
      _
    $region7: #{linear_encoder.1} parent=1 // pred_check_branch
      %13 = sbr.rel (0) target = $region9
    $region8: #{linear_encoder.1} parent=1 // pred_region
      %s15 = ssub.s32 1024, 1024
      %16 = vsyncadd [#allocation3], %s15
      %s17 = sshll.u32 [#allocation2], 4
      %s18 = int_to_ptr.vmem [resolvable:$true] %s17
      %23 = dma.hbm_to_vmem [thread:$0]  %s1, 1024, %s18, [#allocation3], 64, 64, 4
    $region9: #{linear_encoder.1} parent=1 // pred_fallthru
      _
    // Predicated region
    $region10: #{linear_encoder.1} parent=1 // pred_check
      _
    $region11: #{linear_encoder.1} parent=1 // pred_check_branch
      %25 = sbr.rel (0) target = $region13
    $region12: #{linear_encoder.1} parent=1 // pred_region
      _
    $region13: #{linear_encoder.1} parent=1 // pred_fallthru
      _
    // Predicated region
    $region14: #{linear_encoder.1} parent=1 // pred_check
      _
    $region15: #{linear_encoder.1} parent=1 // pred_check_branch
      %27 = sbr.rel (0) target = $region17
    $region16: #{linear_encoder.1} parent=1 // pred_region
      %28 = dma.done [#allocation3], 1024
    $region17: #{linear_encoder.1} parent=1 // pred_fallthru
      _
    %v30 = vld [vmem:[%s0] sm:$0xf]
    %v31 = vld [vmem:[#allocation2] sm:$0xf]
    %v32 = vld [vmem:[#allocation2 + $0x4] sm:$0xf]
    %v33 = vld [vmem:[#allocation2 + $0x8] sm:$0xf]
    %v34 = vld [vmem:[#allocation2 + $0xc] sm:$0xf]
    %v35 = vld [vmem:[#allocation2 + $0x10] sm:$0xf]
    %v36 = vld [vmem:[#allocation2 + $0x14] sm:$0xf]
    %v37 = vld [vmem:[#allocation2 + $0x18] sm:$0xf]
    %v38 = vld [vmem:[#allocation2 + $0x1c] sm:$0xf]
    %v39 = vld [vmem:[#allocation2 + $0x20] sm:$0xf]
    %v40 = vld [vmem:[#allocation2 + $0x24] sm:$0xf]
    %v41 = vld [vmem:[#allocation2 + $0x28] sm:$0xf]
    %v42 = vld [vmem:[#allocation2 + $0x2c] sm:$0xf]
    %v43 = vld [vmem:[#allocation2 + $0x30] sm:$0xf]
    %v44 = vld [vmem:[#allocation2 + $0x34] sm:$0xf]
    %v45 = vld [vmem:[#allocation2 + $0x38] sm:$0xf]
    %v46 = vld [vmem:[#allocation2 + $0x3c] sm:$0xf]
    %v47 = vld [vmem:[%s2] sm:$0x1]
    %v49 = vlaneseq
    %v50 = vshrl.u32 %v49, 7
    %v51 = vsub.s32 0, %v50
    %v52 = vrot.slane %v47, %v51
    %v70 = vunpack.c.l.b16 %v31
    %v71 = vunpack.c.l.b16 %v32
    %v72 = vunpack.c.l.b16 %v33
    %v73 = vunpack.c.l.b16 %v34
    %v74 = vunpack.c.l.b16 %v35
    %v75 = vunpack.c.l.b16 %v36
    %v76 = vunpack.c.l.b16 %v37
    %v77 = vunpack.c.l.b16 %v38
    %v78 = vunpack.c.l.b16 %v39
    %v79 = vunpack.c.l.b16 %v40
    %v80 = vunpack.c.l.b16 %v41
    %v81 = vunpack.c.l.b16 %v42
    %v82 = vunpack.c.l.b16 %v43
    %v83 = vunpack.c.l.b16 %v44
    %v84 = vunpack.c.l.b16 %v45
    %v85 = vunpack.c.l.b16 %v46
    %v86 = vpack.c.b16 %v71, %v70
    %v87 = vpack.c.b16 %v73, %v72
    %v88 = vpack.c.b16 %v75, %v74
    %v89 = vpack.c.b16 %v77, %v76
    %v90 = vpack.c.b16 %v79, %v78
    %v91 = vpack.c.b16 %v81, %v80
    %v92 = vpack.c.b16 %v83, %v82
    %v93 = vpack.c.b16 %v85, %v84
    %102 = vmatprep.subr.bf16.mxu0 0
    %103 = vmatpush1.bf16.msra.mxu0 %v93
    %104 = vmatprep.subr.bf16.mxu0 0
    %105 = vmatpush1.bf16.msra.mxu0 %v92
    %106 = vmatprep.subr.bf16.mxu0 0
    %107 = vmatpush1.bf16.msra.mxu0 %v91
    %108 = vmatprep.subr.bf16.mxu0 0
    %109 = vmatpush1.bf16.msra.mxu0 %v90
    %110 = vmatprep.subr.bf16.mxu0 0
    %111 = vmatpush1.bf16.msra.mxu0 %v89
    %112 = vmatprep.subr.bf16.mxu0 0
    %113 = vmatpush1.bf16.msra.mxu0 %v88
    %114 = vmatprep.subr.bf16.mxu0 0
    %115 = vmatpush1.bf16.msra.mxu0 %v87
    %116 = vmatprep.subr.bf16.mxu0 0
    %117 = vmatpush1.bf16.msra.mxu0 %v86
    %118 = vmatprep.subr.bf16.mxu0 0
    %119 = vmatpush2.bf16.msra.mxu0 0
    %120 = vmatprep.subr.bf16.mxu0 0
    %121 = vmatpush2.bf16.msra.mxu0 0
    %122 = vmatprep.subr.bf16.mxu0 0
    %123 = vmatpush2.bf16.msra.mxu0 0
    %124 = vmatprep.subr.bf16.mxu0 0
    %125 = vmatpush2.bf16.msra.mxu0 0
    %126 = vmatprep.subr.bf16.mxu0 0
    %127 = vmatpush2.bf16.msra.mxu0 0
    %128 = vmatprep.subr.bf16.mxu0 0
    %129 = vmatpush2.bf16.msra.mxu0 0
    %130 = vmatprep.subr.bf16.mxu0 0
    %131 = vmatpush2.bf16.msra.mxu0 0
    %132 = vmatprep.subr.bf16.mxu0 0
    %133 = vmatpush2.bf16.msra.mxu0 0
    %134 = vmatprep.mubr.bf16.mxu0 0
    %135 = vmatmul.mubr.bf16.gmra.mxu0 %v30
    %v136 = vpop.f32.mrf.mxu0
    %v137 = vadd.f32 %v52, %v136
    %v138 = vpop.f32.mrf.mxu0
    %v139 = vpop.f32.mrf.mxu0
    %v140 = vpop.f32.mrf.mxu0
    %141 = vdwg.mxu0
    %142 = vst [vmem:[#allocation5] sm:$0xff] %v137
    // Predicated region
    $region18: #{linear_encoder.1} parent=1 // pred_check
      _
    $region19: #{linear_encoder.1} parent=1 // pred_check_branch
      %144 = sbr.rel (0) target = $region21
    $region20: #{linear_encoder.1} parent=1 // pred_region
      %s146 = ssub.s32 128, 128
      %147 = vsyncadd [#allocation4], %s146
      %s149 = sshll.u32 [#allocation5], 4
      %s150 = int_to_ptr.vmem [resolvable:$true] %s149
      %152 = dma.vmem_to_hbm [thread:$0]  %s150, 128, %s3, [#allocation4]
    $region21: #{linear_encoder.1} parent=1 // pred_fallthru
      _
    // Predicated region
    $region22: #{linear_encoder.1} parent=1 // pred_check
      _
    $region23: #{linear_encoder.1} parent=1 // pred_check_branch
      %154 = sbr.rel (0) target = $region25
    $region24: #{linear_encoder.1} parent=1 // pred_region
      %155 = dma.done [#allocation4], 128
    $region25: #{linear_encoder.1} parent=1 // pred_fallthru
      _
    %156 = vsyncpa [#allocation3], 1
    %157 = vsyncpa [#allocation4], 1

</llo_original>
